<compile_context>
chip_gen: v6e
topology: v6e:2x2x1
jax: 0.10.0
libtpu: 0.0.40
codegen_flags: <defaults>
</compile_context>

<pallas_src>
import numpy as np
import jax
import jax.numpy as jnp
from jax.experimental import pallas as pl
from jax.experimental.pallas import tpu as pltpu


def self_output_kernel(x_ref, resid_ref, w_ref, b_ref, out_ref):
    """out = x @ W + b + resid for one (TM, H) row tile.

    x_ref, resid_ref, out_ref : (TM, H) float32
    w_ref                     : (H, H)  bfloat16, (in_features, out_features)
    b_ref                     : (1, H)  float32
    """
    # Dense projection on the MXU: bf16 operands, f32 accumulation.
    acc = jnp.dot(x_ref[...].astype(jnp.bfloat16), w_ref[...],
                  preferred_element_type=jnp.float32)
    # Dropout is identity at inference; bias + residual add in f32 on the VPU.
    out_ref[...] = acc + b_ref[...] + resid_ref[...]


def _pick_row_tile(m, cap=512):
    """Largest power-of-two row tile (multiple of 8) dividing m, capped at `cap`.

    Keeps >= 2 grid steps when possible so the DMA pipeline has depth.
    """
    if m % 8 != 0:
        return m                      # full block (allowed when == array dim)
    t = 8
    while t * 2 <= min(m, cap) and m % (t * 2) == 0:
        t *= 2
    if t == m and m > 8:
        t //= 2
    return t


def alexatm_self_output(hidden_states, input_tensor, weight, bias):
    """Pallas forward of AlexaTMSelfOutput (inference; dropout == identity).

    hidden_states, input_tensor : (..., H) float32
    weight                      : (H, H) float32, torch nn.Linear layout (out, in)
    bias                        : (H,)   float32
    """
    orig_shape = hidden_states.shape
    H = orig_shape[-1]
    x = hidden_states.reshape(-1, H).astype(jnp.float32)
    r = input_tensor.reshape(-1, H).astype(jnp.float32)
    M = x.shape[0]

    tm = _pick_row_tile(M)
    grid = (pl.cdiv(M, tm),)

    # (in_features, out_features), bf16 for the MXU; halves weight VMEM.
    w = jnp.asarray(weight).T.astype(jnp.bfloat16)
    b = jnp.asarray(bias).reshape(1, H).astype(jnp.float32)

    out = pl.pallas_call(
        self_output_kernel,
        out_shape=jax.ShapeDtypeStruct((M, H), jnp.float32),
        grid=grid,
        in_specs=[
            pl.BlockSpec((tm, H), lambda i: (i, 0)),   # hidden_states row tile
            pl.BlockSpec((tm, H), lambda i: (i, 0)),   # residual row tile
            pl.BlockSpec((H, H), lambda i: (0, 0)),    # weight: fetched once
            pl.BlockSpec((1, H), lambda i: (0, 0)),    # bias:   fetched once
        ],
        out_specs=pl.BlockSpec((tm, H), lambda i: (i, 0)),
        input_output_aliases={1: 0},                   # reuse residual's HBM buffer
        compiler_params=pltpu.CompilerParams(
            dimension_semantics=("parallel",),
            vmem_limit_bytes=64 * 1024 * 1024,
        ),
    )(x, r, w, b)
    return out.reshape(orig_shape)


# ----------------------------------------------------------------------------
# Pure-JAX references (for verification)
# ----------------------------------------------------------------------------

def reference_self_output(hidden_states, input_tensor, weight, bias,
                          *, bf16_matmul=True):
    w = jnp.asarray(weight).T
    if bf16_matmul:
        h = jnp.dot(hidden_states.astype(jnp.bfloat16), w.astype(jnp.bfloat16),
                    preferred_element_type=jnp.float32)
    else:
        h = jnp.dot(hidden_states, w, preferred_element_type=jnp.float32)
    return h + jnp.asarray(bias) + input_tensor


# ----------------------------------------------------------------------------
# Driver
# ----------------------------------------------------------------------------

if __name__ == "__main__":
    B, S, H = 2, 8, 32   # small shapes consistent with the module (hidden=32)

    key = jax.random.PRNGKey(0)
    k1, k2, k3, k4 = jax.random.split(key, 4)
    hidden_states = jax.random.normal(k1, (B, S, H), jnp.float32)
    input_tensor = jax.random.normal(k2, (B, S, H), jnp.float32)
    weight = 0.02 * jax.random.normal(k3, (H, H), jnp.float32)  # torch (out, in)
    bias = 0.02 * jax.random.normal(k4, (H,), jnp.float32)

    # Compute references BEFORE the kernel call (kernel output aliases the
    # residual input's buffer).
    ref_bf16 = np.asarray(reference_self_output(
        hidden_states, input_tensor, weight, bias, bf16_matmul=True))
    ref_f32 = np.asarray(reference_self_output(
        hidden_states, input_tensor, weight, bias, bf16_matmul=False))

    out = alexatm_self_output(hidden_states, input_tensor, weight, bias)
    out = jax.block_until_ready(out)
    out_np = np.asarray(out)

    # Exact check against the same bf16-matmul / f32-accumulate path.
    np.testing.assert_allclose(out_np, ref_bf16, atol=1e-4, rtol=1e-4)
    # Loose check against the exact-f32 torch semantics (bf16 rounding only).
    np.testing.assert_allclose(out_np, ref_f32, atol=2e-2, rtol=2e-2)

    print("KERNEL_OK")
</pallas_src>

<mosaic_0001>
module attributes {stable_mosaic.version = 11 : i64} {
  func.func @self_output_kernel(%arg0: i32, %arg1: memref<8x32xf32, #tpu.memory_space<vmem>>, %arg2: memref<8x32xf32, #tpu.memory_space<vmem>>, %arg3: memref<32x32xbf16, #tpu.memory_space<vmem>>, %arg4: memref<1x32xf32, #tpu.memory_space<vmem>>, %arg5: memref<8x32xf32, #tpu.memory_space<vmem>>) attributes {dimension_semantics = [#tpu.dimension_semantics<parallel>], iteration_bounds = array<i64: 2>, scalar_prefetch = 0 : i64, scratch_operands = 0 : i64, tpu.core_type = #tpu.core_type<tc>, window_params = [{transform_indices = @transform_0, window_bounds = array<i64: 8, 32>}, {transform_indices = @transform_1, window_bounds = array<i64: 8, 32>}, {pipeline_mode = #tpu.pipeline_mode<synchronous>, transform_indices = @transform_2, window_bounds = array<i64: 32, 32>}, {pipeline_mode = #tpu.pipeline_mode<synchronous>, transform_indices = @transform_3, window_bounds = array<i64: 1, 32>}, {transform_indices = @transform_4, window_bounds = array<i64: 8, 32>}]} {
    %c0 = arith.constant 0 : index
    %c0_0 = arith.constant 0 : index
    %0 = vector.load %arg1[%c0, %c0_0] : memref<8x32xf32, #tpu.memory_space<vmem>>, vector<8x32xf32>
    %1 = arith.truncf %0 : vector<8x32xf32> to vector<8x32xbf16>
    %c0_1 = arith.constant 0 : index
    %c0_2 = arith.constant 0 : index
    %2 = vector.load %arg3[%c0_1, %c0_2] : memref<32x32xbf16, #tpu.memory_space<vmem>>, vector<32x32xbf16>
    %cst = arith.constant dense<0.000000e+00> : vector<8x32xf32>
    %3 = tpu.matmul %1, %2, %cst {dimension_numbers = #tpu.dot_dimension_numbers<[1], [0], [0], [1], [0, 0, 1, 1], [], []>} : vector<8x32xbf16>, vector<32x32xbf16>, vector<8x32xf32> -> vector<8x32xf32>
    %c0_3 = arith.constant 0 : index
    %c0_4 = arith.constant 0 : index
    %4 = vector.load %arg4[%c0_3, %c0_4] : memref<1x32xf32, #tpu.memory_space<vmem>>, vector<1x32xf32>
    %5 = vector.broadcast %4 : vector<1x32xf32> to vector<8x32xf32>
    %6 = arith.addf %3, %5 : vector<8x32xf32>
    %c0_5 = arith.constant 0 : index
    %c0_6 = arith.constant 0 : index
    %7 = vector.load %arg2[%c0_5, %c0_6] : memref<8x32xf32, #tpu.memory_space<vmem>>, vector<8x32xf32>
    %8 = arith.addf %6, %7 : vector<8x32xf32>
    %c0_7 = arith.constant 0 : index
    %c0_8 = arith.constant 0 : index
    %9 = vector.load %arg5[%c0_7, %c0_8] : memref<8x32xf32, #tpu.memory_space<vmem>>, vector<8x32xf32>
    tpu.vector_store %arg5[%c0_7, %c0_8], %8 {strides = array<i32>} : memref<8x32xf32, #tpu.memory_space<vmem>>, vector<8x32xf32>,
    return
  }
  func.func @transform_0(%arg0: i32) -> (i32, i32) {
    %c0_i32 = arith.constant 0 : i32
    %c0_i32_0 = arith.constant 0 : i32
    return %arg0, %c0_i32 : i32, i32
  }
  func.func @transform_1(%arg0: i32) -> (i32, i32) {
    %c0_i32 = arith.constant 0 : i32
    %c0_i32_0 = arith.constant 0 : i32
    return %arg0, %c0_i32 : i32, i32
  }
  func.func @transform_2(%arg0: i32) -> (i32, i32) {
    %c0_i32 = arith.constant 0 : i32
    %c0_i32_0 = arith.constant 0 : i32
    %c0_i32_1 = arith.constant 0 : i32
    return %c0_i32, %c0_i32_0 : i32, i32
  }
  func.func @transform_3(%arg0: i32) -> (i32, i32) {
    %c0_i32 = arith.constant 0 : i32
    %c0_i32_0 = arith.constant 0 : i32
    %c0_i32_1 = arith.constant 0 : i32
    return %c0_i32, %c0_i32_0 : i32, i32
  }
  func.func @transform_4(%arg0: i32) -> (i32, i32) {
    %c0_i32 = arith.constant 0 : i32
    %c0_i32_0 = arith.constant 0 : i32
    return %arg0, %c0_i32 : i32, i32
  }
}

</mosaic_0001>

<llo_original>
// kernel: tpu_custom_call.1
$region0: #{tpu_custom_call.1}
  #allocation0 [shape = 'u32[]', space=smem, size = 0x4, offset = 0x4, fixed_abs, tag = 'smem constant byte address 0x4 - core index']
  #allocation1 [shape = 'u32[144,128]{1,0:T(1,128)}', space=vmem, size = 0x12000, scoped, tag = 'internal scratch']
  %s0 = inlined_call_operand.vmem [shape: f32[16,32], index: 0, kind: input, shape index: {}]
  %s1 = inlined_call_operand.hbm [shape: f32[16,32], index: 1, kind: input, shape index: {}, may-alias: {1,4}]
  %s2 = inlined_call_operand.vmem [shape: bf16[32,32], index: 2, kind: input, shape index: {}]
  %s3 = inlined_call_operand.hbm [shape: f32[1,32], index: 3, kind: input, shape index: {}]
  %s4 = inlined_call_operand.hbm [shape: f32[16,32], index: 4, kind: output, shape index: {}, may-alias: {1,4}]
  %s5 = sld [smem:[#allocation0]]
  $region57: #{tpu_custom_call.1} parent=0
    _
  %s7 = ssub.s32 1, %s5
  %s8 = scalar_select 0, %s7, %s5
  $region1: #{tpu_custom_call.1} parent=0
    #allocation2 [shape = 'u8[8192]{0}', space=vmem, size = 0x2000, scoped, tag = 'input window, operand 1']
    #allocation3 [shape = 's32[2]{0}', space=sflag, size = 0x8, scoped, tag = 'scoped memory for tpu_custom_call.1']
    #allocation4 [shape = 's32[2]{0}', space=sflag, size = 0x8, scoped, tag = 'scoped memory for tpu_custom_call.1']
    #allocation5 [shape = 'u8[512]{0}', space=vmem, size = 0x400, scoped, tag = 'input window, operand 3, single buffered']
    #allocation6 [shape = 's32[1]{0}', space=sflag, size = 0x4, scoped, tag = 'scoped memory for tpu_custom_call.1']
    #allocation7 [shape = 'u8[8192]{0}', space=vmem, size = 0x2000, scoped, tag = 'output window, operand 0']
    %9 = vsyncpa [#allocation3], 0
    %s10 = scalar_lea.sflag [#allocation3], 1
    %11 = vsyncpa %s10, 0
    %12 = vsyncpa [#allocation6], 0
    %13 = vsyncpa [#allocation4], 0
    %s14 = scalar_lea.sflag [#allocation4], 1
    %15 = vsyncpa %s14, 0
    loop: start=0, step=1, limit=4
    $region2: #{tpu_custom_call.1} parent=1 // loop_pre_header
      _
    $region3: #{tpu_custom_call.1} parent=1 // loop_header
      %s17 = sphi 0, %s21
      %p18 = scmp.ge.s32.totalorder %s17, 4
      %s27 = sphi 0, %s29
      %s30 = sphi 0, %s27
      %s31 = sphi 0, %s30
      %s47 = sphi 0, %s31
      %s53 = sphi 0, %s55
      %s56 = sphi 0, %s53
      %s57 = sphi 0, %s56
      %s73 = sphi 0, %s57
      %s77 = sphi 0, %s77
      %s79 = sphi 0, %s77
      %s80 = sphi 0, %s79
      %s94 = sphi 0, %s80
      %s98 = sphi 0, %s98
      %s100 = sphi 0, %s98
      %s101 = sphi 0, %s100
      %s115 = sphi 0, %s101
      %s121 = sphi 0, %s123
      %s124 = sphi 0, %s121
      %s125 = sphi 0, %s124
      %s141 = sphi 0, %s125
    $region4: #{tpu_custom_call.1} parent=1 // loop_header_branch
      %20 = sbr.rel (%p18) target = $region8
    $region5: #{tpu_custom_call.1} parent=1 // loop_body
      %s22 = ssub.s32 %s17, 1
      %s23 = ssub.s32 %s17, 2
      %s24 = sadd.s32 %s17, 1
      %s25 = ssub.s32 %s17, %s24
      %p26 = scmp.eq.s32.totalorder %s25, 0
      %s28 = sadd.s32 %s27, 1
      %s29 = scalar_select %p26, %s27, %s28
      %p32 = pneg %p26
      %p33 = scmp.eq.s32.totalorder %s17, 1
      %p34 = por %p32, %p33
      %p35 = scmp.ne.s32.totalorder %s27, %s30
      %p36 = scmp.eq.s32.totalorder %s17, 0
      %p37 = por %p35, %p36
      %p38 = scmp.ne.s32.totalorder %s27, %s30
      %p39 = scmp.eq.s32.totalorder %s22, 1
      %p40 = por %p38, %p39
      %p41 = scmp.ne.s32.totalorder %s30, %s31
      %p42 = scmp.eq.s32.totalorder %s22, 0
      %p43 = por %p41, %p42
      %p44 = scmp.ne.s32.totalorder %s30, %s31
      %p45 = scmp.eq.s32.totalorder %s23, 1
      %p46 = por %p44, %p45
      %p48 = scmp.ne.s32.totalorder %s31, %s47
      %p49 = scmp.eq.s32.totalorder %s23, 0
      %p50 = por %p48, %p49
      %s51 = ssub.s32 %s17, %s24
      %p52 = scmp.eq.s32.totalorder %s51, 0
      %s54 = sadd.s32 %s53, 1
      %s55 = scalar_select %p52, %s53, %s54
      %p58 = pneg %p52
      %p59 = scmp.eq.s32.totalorder %s17, 1
      %p60 = por %p58, %p59
      %p61 = scmp.ne.s32.totalorder %s53, %s56
      %p62 = scmp.eq.s32.totalorder %s17, 0
      %p63 = por %p61, %p62
      %p64 = scmp.ne.s32.totalorder %s53, %s56
      %p65 = scmp.eq.s32.totalorder %s22, 1
      %p66 = por %p64, %p65
      %p67 = scmp.ne.s32.totalorder %s56, %s57
      %p68 = scmp.eq.s32.totalorder %s22, 0
      %p69 = por %p67, %p68
      %p70 = scmp.ne.s32.totalorder %s56, %s57
      %p71 = scmp.eq.s32.totalorder %s23, 1
      %p72 = por %p70, %p71
      %p74 = scmp.ne.s32.totalorder %s57, %s73
      %p75 = scmp.eq.s32.totalorder %s23, 0
      %p76 = por %p74, %p75
      %s78 = sadd.s32 %s77, 1
      %p81 = scmp.eq.s32.totalorder %s17, 1
      %p82 = scmp.ne.s32.totalorder %s77, %s79
      %p83 = scmp.eq.s32.totalorder %s17, 0
      %p84 = por %p82, %p83
      %p85 = scmp.ne.s32.totalorder %s77, %s79
      %p86 = scmp.eq.s32.totalorder %s22, 1
      %p87 = por %p85, %p86
      %p88 = scmp.ne.s32.totalorder %s79, %s80
      %p89 = scmp.eq.s32.totalorder %s22, 0
      %p90 = por %p88, %p89
      %p91 = scmp.ne.s32.totalorder %s79, %s80
      %p92 = scmp.eq.s32.totalorder %s23, 1
      %p93 = por %p91, %p92
      %p95 = scmp.ne.s32.totalorder %s80, %s94
      %p96 = scmp.eq.s32.totalorder %s23, 0
      %p97 = por %p95, %p96
      %s99 = sadd.s32 %s98, 1
      %p102 = scmp.eq.s32.totalorder %s17, 1
      %p103 = scmp.ne.s32.totalorder %s98, %s100
      %p104 = scmp.eq.s32.totalorder %s17, 0
      %p105 = por %p103, %p104
      %p106 = scmp.ne.s32.totalorder %s98, %s100
      %p107 = scmp.eq.s32.totalorder %s22, 1
      %p108 = por %p106, %p107
      %p109 = scmp.ne.s32.totalorder %s100, %s101
      %p110 = scmp.eq.s32.totalorder %s22, 0
      %p111 = por %p109, %p110
      %p112 = scmp.ne.s32.totalorder %s100, %s101
      %p113 = scmp.eq.s32.totalorder %s23, 1
      %p114 = por %p112, %p113
      %p116 = scmp.ne.s32.totalorder %s101, %s115
      %p117 = scmp.eq.s32.totalorder %s23, 0
      %p118 = por %p116, %p117
      %s119 = ssub.s32 %s17, %s24
      %p120 = scmp.eq.s32.totalorder %s119, 0
      %s122 = sadd.s32 %s121, 1
      %s123 = scalar_select %p120, %s121, %s122
      %p126 = pneg %p120
      %p127 = scmp.eq.s32.totalorder %s17, 1
      %p128 = por %p126, %p127
      %p129 = scmp.ne.s32.totalorder %s121, %s124
      %p130 = scmp.eq.s32.totalorder %s17, 0
      %p131 = por %p129, %p130
      %p132 = scmp.ne.s32.totalorder %s121, %s124
      %p133 = scmp.eq.s32.totalorder %s22, 1
      %p134 = por %p132, %p133
      %p135 = scmp.ne.s32.totalorder %s124, %s125
      %p136 = scmp.eq.s32.totalorder %s22, 0
      %p137 = por %p135, %p136
      %p138 = scmp.ne.s32.totalorder %s124, %s125
      %p139 = scmp.eq.s32.totalorder %s23, 1
      %p140 = por %p138, %p139
      %p142 = scmp.ne.s32.totalorder %s125, %s141
      %p143 = scmp.eq.s32.totalorder %s23, 0
      %p144 = por %p142, %p143
      %p145 = scmp.le.s32.totalorder 1, %s17
      %p146 = scmp.lt.s32.totalorder %s17, 3
      %p147 = pnand %p145, %p146
      %p148 = pneg %p147
      // Predicated region
      $region9: #{tpu_custom_call.1} parent=5 // pred_check
        _
      $region10: #{tpu_custom_call.1} parent=5 // pred_check_branch
        %150 = sbr.rel (%p147) target = $region12
      $region11: #{tpu_custom_call.1} parent=5 // pred_region
        %s151 = ssub.s32 %s17, 1
        // Predicated region
        $region13: #{tpu_custom_call.1} parent=11 // pred_check
          %p152 = pneg %p90
        $region14: #{tpu_custom_call.1} parent=11 // pred_check_branch
          %154 = sbr.rel (%p152) target = $region16
        $region15: #{tpu_custom_call.1} parent=11 // pred_region
          _
        $region16: #{tpu_custom_call.1} parent=11 // pred_fallthru
          _
        // Predicated region
        $region17: #{tpu_custom_call.1} parent=11 // pred_check
          %p155 = pneg %p111
        $region18: #{tpu_custom_call.1} parent=11 // pred_check_branch
          %157 = sbr.rel (%p155) target = $region20
        $region19: #{tpu_custom_call.1} parent=11 // pred_region
          %s159 = ssub.s32 16, 16
          %160 = vsyncadd [#allocation6], %s159
          %s162 = sshll.u32 [#allocation5], 4
          %s163 = int_to_ptr.vmem [resolvable:$true] %s162
          %165 = dma.hbm_to_vmem [thread:$0]  %s3, 16, %s163, [#allocation6]
        $region20: #{tpu_custom_call.1} parent=11 // pred_fallthru
          _
      $region12: #{tpu_custom_call.1} parent=5 // pred_fallthru
        _
      %p166 = scmp.lt.s32.totalorder %s17, 2
      // Predicated region
      $region21: #{tpu_custom_call.1} parent=5 // pred_check
        %p167 = pneg %p166
      $region22: #{tpu_custom_call.1} parent=5 // pred_check_branch
        %169 = sbr.rel (%p167) target = $region24
      $region23: #{tpu_custom_call.1} parent=5 // pred_region
        // Predicated region
        $region25: #{tpu_custom_call.1} parent=23 // pred_check
          %p170 = pneg %p37
        $region26: #{tpu_custom_call.1} parent=23 // pred_check_branch
          %172 = sbr.rel (%p170) target = $region28
        $region27: #{tpu_custom_call.1} parent=23 // pred_region
          %p173 = scmp.lt.s32.totalorder %s17, 1
          %s174 = scalar_select %p173, %s17, 1
          %s175 = smul.addr %s174, 8
          %s176 = scalar_lea.vmem %s0, %s175
        $region28: #{tpu_custom_call.1} parent=23 // pred_fallthru
          _
        // Predicated region
        $region29: #{tpu_custom_call.1} parent=23 // pred_check
          %p177 = pneg %p63
        $region30: #{tpu_custom_call.1} parent=23 // pred_check_branch
          %179 = sbr.rel (%p177) target = $region32
        $region31: #{tpu_custom_call.1} parent=23 // pred_region
          %s180 = sand.u32 %s53, 1
          %s181 = scalar_lea.sflag [#allocation3], %s180
          %s182 = sand.u32 %s53, 1
          %s183 = smul.addr %s182, 8
          %s184 = scalar_lea.vmem [#allocation2], %s183
          %s186 = ssub.s32 128, 128
          %187 = vsyncadd %s181, %s186
          %s188 = smul.addr %s17, 128
          %s189 = scalar_lea.hbm %s1, %s188
          %s191 = sshll.u32 %s184, 4
          %s192 = int_to_ptr.vmem [resolvable:$true] %s191
          %194 = dma.hbm_to_vmem [thread:$0]  %s189, 128, %s192, %s181
        $region32: #{tpu_custom_call.1} parent=23 // pred_fallthru
          _
      $region24: #{tpu_custom_call.1} parent=5 // pred_fallthru
        _
      %p195 = scmp.le.s32.totalorder 1, %s17
      %p196 = scmp.lt.s32.totalorder %s17, 3
      %p197 = pnand %p195, %p196
      %p198 = pneg %p197
      // Predicated region
      $region33: #{tpu_custom_call.1} parent=5 // pred_check
        _
      $region34: #{tpu_custom_call.1} parent=5 // pred_check_branch
        %200 = sbr.rel (%p197) target = $region36
      $region35: #{tpu_custom_call.1} parent=5 // pred_region
        %s201 = ssub.s32 %s17, 1
        %s202 = sand.u32 %s56, 1
        %s203 = scalar_lea.sflag [#allocation3], %s202
        %s204 = sand.u32 %s56, 1
        %s205 = smul.addr %s204, 8
        %s206 = scalar_lea.vmem [#allocation2], %s205
        // Predicated region
        $region37: #{tpu_custom_call.1} parent=35 // pred_check
          %p207 = pneg %p69
        $region38: #{tpu_custom_call.1} parent=35 // pred_check_branch
          %209 = sbr.rel (%p207) target = $region40
        $region39: #{tpu_custom_call.1} parent=35 // pred_region
          %210 = dma.done %s203, 128
        $region40: #{tpu_custom_call.1} parent=35 // pred_fallthru
          _
        // Predicated region
        $region41: #{tpu_custom_call.1} parent=35 // pred_check
          %p211 = pneg %p111
        $region42: #{tpu_custom_call.1} parent=35 // pred_check_branch
          %213 = sbr.rel (%p211) target = $region44
        $region43: #{tpu_custom_call.1} parent=35 // pred_region
          %214 = dma.done [#allocation6], 16
        $region44: #{tpu_custom_call.1} parent=35 // pred_fallthru
          _
        %p215 = scmp.lt.s32.totalorder %s22, 1
        %s216 = scalar_select %p215, %s22, 1
        %s217 = smul.addr %s216, 8
        %s218 = scalar_lea.vmem %s0, %s217
        %p219 = pneg %p43
        %p220 = pneg %p40
        %s221 = sand.u32 %s56, 1
        %s222 = scalar_lea.sflag [#allocation3], %s221
        %s223 = sand.u32 %s56, 1
        %s224 = smul.addr %s223, 8
        %s225 = scalar_lea.vmem [#allocation2], %s224
        %p226 = pneg %p69
        %p227 = pneg %p66
        %p228 = pneg %p90
        %p229 = pneg %p87
        %p230 = pneg %p111
        %p231 = pneg %p108
        %p232 = pneg %p137
        %p233 = pneg %p134
        %s234 = sand.u32 %s124, 1
        %s235 = scalar_lea.sflag [#allocation4], %s234
        %s236 = sand.u32 %s124, 1
        %s237 = smul.addr %s236, 8
        %s238 = scalar_lea.vmem [#allocation7], %s237
        %p239 = scmp.lt.s32.totalorder %s22, 1
        %s240 = scalar_select %p239, %s22, 1
        %s241 = smul.addr %s240, 8
        %s242 = scalar_lea.vmem %s0, %s241
        %v244 = vld [vmem:[%s242] sm:$0xff]
        %v245 = vpack.c.bf16 %v244, %v244
        %v246 = vld [vmem:[%s2] sm:$0xf]
        %v247 = vld [vmem:[%s2 + $0x4] sm:$0xf]
        %v248 = vld [vmem:[%s2 + $0x8] sm:$0xf]
        %v249 = vld [vmem:[%s2 + $0xc] sm:$0xf]
        %v250 = vld [vmem:[#allocation5] sm:$0x1]
        %v252 = vlaneseq
        %v253 = vshrl.u32 %v252, 7
        %v254 = vsub.s32 0, %v253
        %v255 = vrot.slane %v250, %v254
        %v261 = vunpack.c.l.b16 %v246
        %v262 = vunpack.c.l.b16 %v247
        %v263 = vunpack.c.l.b16 %v248
        %v264 = vunpack.c.l.b16 %v249
        %v265 = vpack.c.b16 %v262, %v261
        %v266 = vpack.c.b16 %v264, %v263
        %vm269 = vcmask 261120
        %v271 = vsel %vm269, %v245, 0
        %273 = vmatprep.subr.bf16.mxu0 0
        %274 = vmatpush1.bf16.msra.mxu0 0
        %275 = vmatprep.subr.bf16.mxu0 0
        %276 = vmatpush1.bf16.msra.mxu0 0
        %277 = vmatprep.subr.bf16.mxu0 0
        %278 = vmatpush1.bf16.msra.mxu0 0
        %279 = vmatprep.subr.bf16.mxu0 0
        %280 = vmatpush1.bf16.msra.mxu0 0
        %281 = vmatprep.subr.bf16.mxu0 0
        %282 = vmatpush1.bf16.msra.mxu0 0
        %283 = vmatprep.subr.bf16.mxu0 0
        %284 = vmatpush1.bf16.msra.mxu0 0
        %285 = vmatprep.subr.bf16.mxu0 0
        %286 = vmatpush1.bf16.msra.mxu0 %v266
        %287 = vmatprep.subr.bf16.mxu0 0
        %288 = vmatpush1.bf16.msra.mxu0 %v265
        %289 = vmatprep.subr.bf16.mxu0 0
        %290 = vmatpush2.bf16.msra.mxu0 0
        %291 = vmatprep.subr.bf16.mxu0 0
        %292 = vmatpush2.bf16.msra.mxu0 0
        %293 = vmatprep.subr.bf16.mxu0 0
        %294 = vmatpush2.bf16.msra.mxu0 0
        %295 = vmatprep.subr.bf16.mxu0 0
        %296 = vmatpush2.bf16.msra.mxu0 0
        %297 = vmatprep.subr.bf16.mxu0 0
        %298 = vmatpush2.bf16.msra.mxu0 0
        %299 = vmatprep.subr.bf16.mxu0 0
        %300 = vmatpush2.bf16.msra.mxu0 0
        %301 = vmatprep.subr.bf16.mxu0 0
        %302 = vmatpush2.bf16.msra.mxu0 0
        %303 = vmatprep.subr.bf16.mxu0 0
        %304 = vmatpush2.bf16.msra.mxu0 0
        %305 = vmatprep.mubr.bf16.mxu0 0
        %306 = vmatmul.mubr.bf16.gmra.mxu0 %v271
        %v307 = vpop.f32.mrf.mxu0
        %v308 = vadd.f32 %v255, %v307
        %v309 = vpop.f32.mrf.mxu0
        %v310 = vpop.f32.mrf.mxu0
        %v311 = vpop.f32.mrf.mxu0
        %312 = vdwg.mxu0
        %v313 = vld [vmem:[%s206] sm:$0xff]
        %v314 = vadd.f32 %v308, %v313
        %315 = vst.msk [vmem:[%s238] sm:$0xff] %vm269, %v314
        %s316 = sand.u32 %s124, 1
        %s317 = scalar_lea.sflag [#allocation4], %s316
        %s318 = sand.u32 %s124, 1
        %s319 = smul.addr %s318, 8
        %s320 = scalar_lea.vmem [#allocation7], %s319
        // Predicated region
        $region45: #{tpu_custom_call.1} parent=35 // pred_check
          %p321 = pneg %p134
        $region46: #{tpu_custom_call.1} parent=35 // pred_check_branch
          %323 = sbr.rel (%p321) target = $region48
        $region47: #{tpu_custom_call.1} parent=35 // pred_region
          %s325 = ssub.s32 128, 128
          %326 = vsyncadd %s317, %s325
          %s327 = smul.addr %s22, 128
          %s328 = scalar_lea.hbm %s4, %s327
          %s330 = sshll.u32 %s320, 4
          %s331 = int_to_ptr.vmem [resolvable:$true] %s330
          %333 = dma.vmem_to_hbm [thread:$0]  %s331, 128, %s328, %s317
        $region48: #{tpu_custom_call.1} parent=35 // pred_fallthru
          _
      $region36: #{tpu_custom_call.1} parent=5 // pred_fallthru
        _
      %p334 = scmp.le.s32.totalorder 2, %s17
      // Predicated region
      $region49: #{tpu_custom_call.1} parent=5 // pred_check
        %p335 = pneg %p334
      $region50: #{tpu_custom_call.1} parent=5 // pred_check_branch
        %337 = sbr.rel (%p335) target = $region52
      $region51: #{tpu_custom_call.1} parent=5 // pred_region
        %s338 = ssub.s32 %s17, 2
        // Predicated region
        $region53: #{tpu_custom_call.1} parent=51 // pred_check
          %p339 = pneg %p140
        $region54: #{tpu_custom_call.1} parent=51 // pred_check_branch
          %341 = sbr.rel (%p339) target = $region56
        $region55: #{tpu_custom_call.1} parent=51 // pred_region
          %s342 = sand.u32 %s125, 1
          %s343 = scalar_lea.sflag [#allocation4], %s342
          %s344 = sand.u32 %s125, 1
          %s345 = smul.addr %s344, 8
          %s346 = scalar_lea.vmem [#allocation7], %s345
          %347 = dma.done %s343, 128
        $region56: #{tpu_custom_call.1} parent=51 // pred_fallthru
          _
      $region52: #{tpu_custom_call.1} parent=5 // pred_fallthru
        _
    $region6: #{tpu_custom_call.1} parent=1 // loop_footer
      %s21 = sadd.s32 1, %s17
    $region7: #{tpu_custom_call.1} parent=1 // loop_footer_branch
      %16 = sbr.rel target = $region3
    $region8: #{tpu_custom_call.1} parent=1 // loop_exit
      _
    %348 = vsyncpa [#allocation3], 1
    %s349 = scalar_lea.sflag [#allocation3], 1
    %350 = vsyncpa %s349, 1
    %351 = vsyncpa [#allocation6], 1
    %352 = vsyncpa [#allocation4], 1
    %s353 = scalar_lea.sflag [#allocation4], 1
    %354 = vsyncpa %s353, 1

</llo_original>
